<compile_context>
chip_gen: v5e
topology: v5e:2x2
jax: 0.10.0
libtpu: 0.0.40
codegen_flags: <defaults>
</compile_context>

<pallas_src>
import jax
import jax.numpy as jnp
from jax import lax
from jax.experimental import pallas as pl
from jax.experimental.pallas import tpu as pltpu

# Module constants (from the PyTorch spec)
BATCH_SIZE = 1
HIDDEN_SIZE = 4
INPUT_SIZE = 4
NUM_LAYERS = 1   # single-layer RNN only
SEQ_LEN = 8

_HI = jax.lax.Precision.HIGHEST


def make_rnn_kernel(S, B, I, H):
    """Build a whole-sequence RNN kernel for static (S, B, I, H)."""

    def rnn_kernel(x_ref, params_ref, out_ref):
        """Whole-sequence RNN forward in one invocation.

        x_ref     : (S*B, I)      time-major inputs, flattened over (t, b)
        params_ref: (2H+1, ncol)  rows [0:H]=W_ih, [H:2H]=W_hh, [2H]=b_ih+b_hh
        out_ref   : (S*B, H)      output, written once at kernel end
        """
        params = params_ref[...]
        w_ih = params[0:H, 0:I]                  # (H, I)  PyTorch layout
        w_hh = params[H:2 * H, 0:H]              # (H, H)  PyTorch layout
        bias = params[2 * H:2 * H + 1, 0:H]      # (1, H)  b_ih + b_hh

        # Hoisted input projection: one MXU pass covering every time step.
        # xw[n, j] = sum_i x[n, i] * W_ih[j, i] + bias[j]
        xw = lax.dot_general(
            x_ref[...], w_ih,
            dimension_numbers=(((1,), (1,)), ((), ())),
            preferred_element_type=jnp.float32,
            precision=_HI,
        ) + bias                                 # (S*B, H), register-resident

        if B == 1:
            # Per-step chain uses only VPU (broadcast mul/add), XLU (small
            # reduce) and EUP (tanh) — no per-step MXU weight stage / FIFO pop.
            # Carry h in both layouts so neither side needs a per-step flip:
            #   row  form h_row (1,H): lanes hold h
            #   col  form h_col (H,1): sublanes hold h
            whh_t = jnp.transpose(w_hh)          # (H, H), hoisted, once
            xw_col = jnp.transpose(xw)           # (H, S),  hoisted, once

            h_row = jnp.zeros((1, H), jnp.float32)
            h_col = jnp.zeros((H, 1), jnp.float32)
            outs = []
            for t in range(S):                   # static unroll, static slices
                # (h @ W_hh^T)[j] = sum_k h[k] * W_hh[j,k]
                pre_row = xw[t:t + 1, :] + jnp.sum(
                    whh_t * h_col, axis=0, keepdims=True)          # (1, H)
                pre_col = xw_col[:, t:t + 1] + jnp.sum(
                    w_hh * h_row, axis=1, keepdims=True)           # (H, 1)
                h_row = jnp.tanh(pre_row)
                h_col = jnp.tanh(pre_col)
                outs.append(h_row)
            # Single writeback: one concatenate, one store, one output DMA.
            out_ref[...] = jnp.concatenate(outs, axis=0)
        else:
            # General-B fallback (module uses B == 1): per-step MXU matvec.
            h = jnp.zeros((B, H), jnp.float32)
            outs = []
            for t in range(S):
                rec = lax.dot_general(
                    h, w_hh,
                    dimension_numbers=(((1,), (1,)), ((), ())),
                    preferred_element_type=jnp.float32,
                    precision=_HI)
                h = jnp.tanh(xw[t * B:(t + 1) * B, :] + rec)
                outs.append(h)
            out_ref[...] = jnp.concatenate(outs, axis=0)

    return rnn_kernel


def rnn_forward(x, w_ih, w_hh, b_ih, b_hh):
    """Pallas RNN forward.

    x    : (S, B, I) float32, time-major (PyTorch batch_first=False)
    w_ih : (H, I), w_hh : (H, H), b_ih : (H,), b_hh : (H,)  (PyTorch layout)
    returns: (S*B, H) float32  (== out.view(-1, hidden_size))
    """
    S, B, I = x.shape
    H = w_ih.shape[0]
    ncol = max(I, H)

    def pad_cols(a):
        if a.shape[1] == ncol:
            return a
        return jnp.pad(a, ((0, 0), (0, ncol - a.shape[1])))

    x2d = x.reshape(S * B, I)                      # time-major flatten
    # Pack all parameters into one small array -> one parameter DMA.
    params = jnp.concatenate(
        [pad_cols(w_ih), pad_cols(w_hh), pad_cols((b_ih + b_hh)[None, :])],
        axis=0)                                    # (2H+1, ncol)

    out = pl.pallas_call(
        make_rnn_kernel(S, B, I, H),
        out_shape=jax.ShapeDtypeStruct((S * B, H), jnp.float32),
        # No grid: the whole problem lives in VMEM, single invocation.
        in_specs=[
            pl.BlockSpec(memory_space=pltpu.MemorySpace.VMEM),  # x2d
            pl.BlockSpec(memory_space=pltpu.MemorySpace.VMEM),  # packed params
        ],
        out_specs=pl.BlockSpec(memory_space=pltpu.MemorySpace.VMEM),
    )(x2d, params)

    return out


def rnn_reference(x, w_ih, w_hh, b_ih, b_hh):
    """Pure-JAX reference (matches torch.nn.RNN forward with h_0 = 0)."""
    S, B, I = x.shape
    H = w_ih.shape[0]
    h0 = jnp.zeros((B, H), jnp.float32)

    def step(h, x_t):
        h_new = jnp.tanh(
            jnp.dot(x_t, w_ih.T, precision=_HI) + b_ih
            + jnp.dot(h, w_hh.T, precision=_HI) + b_hh)
        return h_new, h_new

    _, hs = lax.scan(step, h0, x)
    return hs.reshape(-1, H)


if __name__ == "__main__":
    key = jax.random.PRNGKey(0)
    k_x, k_wih, k_whh, k_bih, k_bhh = jax.random.split(key, 5)

    # Deterministic parameter init mimicking PyTorch's U(-1/sqrt(H), 1/sqrt(H)).
    bound = 1.0 / jnp.sqrt(jnp.float32(HIDDEN_SIZE))
    w_ih = jax.random.uniform(k_wih, (HIDDEN_SIZE, INPUT_SIZE), jnp.float32, -bound, bound)
    w_hh = jax.random.uniform(k_whh, (HIDDEN_SIZE, HIDDEN_SIZE), jnp.float32, -bound, bound)
    b_ih = jax.random.uniform(k_bih, (HIDDEN_SIZE,), jnp.float32, -bound, bound)
    b_hh = jax.random.uniform(k_bhh, (HIDDEN_SIZE,), jnp.float32, -bound, bound)

    # Input: (seq_len, batch, input_size) — time-major, like the PyTorch module.
    x = jax.random.normal(k_x, (SEQ_LEN, BATCH_SIZE, INPUT_SIZE), jnp.float32)

    out = rnn_forward(x, w_ih, w_hh, b_ih, b_hh)
    out = jax.block_until_ready(out)

    ref = rnn_reference(x, w_ih, w_hh, b_ih, b_hh)
    assert out.shape == (SEQ_LEN * BATCH_SIZE, HIDDEN_SIZE), out.shape
    assert jnp.allclose(out, ref, atol=1e-5, rtol=1e-5), "mismatch vs reference"

    print("KERNEL_OK")
</pallas_src>

<mosaic_0001>
module attributes {stable_mosaic.version = 11 : i64} {
  func.func @rnn_kernel(%arg0: memref<8x4xf32, #tpu.memory_space<vmem>>, %arg1: memref<9x4xf32, #tpu.memory_space<vmem>>, %arg2: memref<8x4xf32, #tpu.memory_space<vmem>>) attributes {dimension_semantics = [], scalar_prefetch = 0 : i64, scratch_operands = 0 : i64, tpu.core_type = #tpu.core_type<tc>} {
    %c0 = arith.constant 0 : index
    %c0_0 = arith.constant 0 : index
    %0 = vector.load %arg1[%c0, %c0_0] : memref<9x4xf32, #tpu.memory_space<vmem>>, vector<9x4xf32>
    %1 = vector.extract_strided_slice %0 {offsets = [0, 0], sizes = [4, 4], strides = [1, 1]} : vector<9x4xf32> to vector<4x4xf32>
    %2 = vector.extract_strided_slice %0 {offsets = [4, 0], sizes = [4, 4], strides = [1, 1]} : vector<9x4xf32> to vector<4x4xf32>
    %3 = vector.extract_strided_slice %0 {offsets = [8, 0], sizes = [1, 4], strides = [1, 1]} : vector<9x4xf32> to vector<1x4xf32>
    %c0_1 = arith.constant 0 : index
    %c0_2 = arith.constant 0 : index
    %4 = vector.load %arg0[%c0_1, %c0_2] : memref<8x4xf32, #tpu.memory_space<vmem>>, vector<8x4xf32>
    %cst = arith.constant dense<0.000000e+00> : vector<8x4xf32>
    %5 = tpu.matmul %4, %1, %cst {dimension_numbers = #tpu.dot_dimension_numbers<[1], [1], [0], [0], [0, 0, 1, 0], [], []>, precision = #tpu.contract_precision<fp32>} : vector<8x4xf32>, vector<4x4xf32>, vector<8x4xf32> -> vector<8x4xf32>
    %6 = vector.broadcast %3 : vector<1x4xf32> to vector<8x4xf32>
    %7 = arith.addf %5, %6 : vector<8x4xf32>
    %8 = tpu.transpose %2, [1, 0] : vector<4x4xf32> -> vector<4x4xf32>
    %9 = tpu.transpose %7, [1, 0] : vector<8x4xf32> -> vector<4x8xf32>
    %cst_3 = arith.constant 0.000000e+00 : f32
    %10 = vector.broadcast %cst_3 : f32 to vector<1x4xf32>
    %cst_4 = arith.constant 0.000000e+00 : f32
    %11 = vector.broadcast %cst_4 : f32 to vector<4x1xf32>
    %12 = vector.extract_strided_slice %7 {offsets = [0, 0], sizes = [1, 4], strides = [1, 1]} : vector<8x4xf32> to vector<1x4xf32>
    %13 = vector.broadcast %11 : vector<4x1xf32> to vector<4x4xf32>
    %14 = arith.mulf %8, %13 : vector<4x4xf32>
    %cst_5 = arith.constant dense<0.000000e+00> : vector<4xf32>
    %15 = vector.multi_reduction <add>, %14, %cst_5 [0] : vector<4x4xf32> to vector<4xf32>
    %16 = vector.shape_cast %15 : vector<4xf32> to vector<1x4xf32>
    %17 = arith.addf %12, %16 : vector<1x4xf32>
    %18 = vector.extract_strided_slice %9 {offsets = [0, 0], sizes = [4, 1], strides = [1, 1]} : vector<4x8xf32> to vector<4x1xf32>
    %19 = vector.broadcast %10 : vector<1x4xf32> to vector<4x4xf32>
    %20 = arith.mulf %2, %19 : vector<4x4xf32>
    %cst_6 = arith.constant dense<0.000000e+00> : vector<4xf32>
    %21 = vector.multi_reduction <add>, %20, %cst_6 [1] : vector<4x4xf32> to vector<4xf32>
    %22 = vector.shape_cast %21 : vector<4xf32> to vector<4x1xf32>
    %23 = arith.addf %18, %22 : vector<4x1xf32>
    %24 = math.tanh %17 : vector<1x4xf32>
    %25 = math.tanh %23 : vector<4x1xf32>
    %26 = vector.extract_strided_slice %7 {offsets = [1, 0], sizes = [1, 4], strides = [1, 1]} : vector<8x4xf32> to vector<1x4xf32>
    %27 = vector.broadcast %25 : vector<4x1xf32> to vector<4x4xf32>
    %28 = arith.mulf %8, %27 : vector<4x4xf32>
    %cst_7 = arith.constant dense<0.000000e+00> : vector<4xf32>
    %29 = vector.multi_reduction <add>, %28, %cst_7 [0] : vector<4x4xf32> to vector<4xf32>
    %30 = vector.shape_cast %29 : vector<4xf32> to vector<1x4xf32>
    %31 = arith.addf %26, %30 : vector<1x4xf32>
    %32 = vector.extract_strided_slice %9 {offsets = [0, 1], sizes = [4, 1], strides = [1, 1]} : vector<4x8xf32> to vector<4x1xf32>
    %33 = vector.broadcast %24 : vector<1x4xf32> to vector<4x4xf32>
    %34 = arith.mulf %2, %33 : vector<4x4xf32>
    %cst_8 = arith.constant dense<0.000000e+00> : vector<4xf32>
    %35 = vector.multi_reduction <add>, %34, %cst_8 [1] : vector<4x4xf32> to vector<4xf32>
    %36 = vector.shape_cast %35 : vector<4xf32> to vector<4x1xf32>
    %37 = arith.addf %32, %36 : vector<4x1xf32>
    %38 = math.tanh %31 : vector<1x4xf32>
    %39 = math.tanh %37 : vector<4x1xf32>
    %40 = vector.extract_strided_slice %7 {offsets = [2, 0], sizes = [1, 4], strides = [1, 1]} : vector<8x4xf32> to vector<1x4xf32>
    %41 = vector.broadcast %39 : vector<4x1xf32> to vector<4x4xf32>
    %42 = arith.mulf %8, %41 : vector<4x4xf32>
    %cst_9 = arith.constant dense<0.000000e+00> : vector<4xf32>
    %43 = vector.multi_reduction <add>, %42, %cst_9 [0] : vector<4x4xf32> to vector<4xf32>
    %44 = vector.shape_cast %43 : vector<4xf32> to vector<1x4xf32>
    %45 = arith.addf %40, %44 : vector<1x4xf32>
    %46 = vector.extract_strided_slice %9 {offsets = [0, 2], sizes = [4, 1], strides = [1, 1]} : vector<4x8xf32> to vector<4x1xf32>
    %47 = vector.broadcast %38 : vector<1x4xf32> to vector<4x4xf32>
    %48 = arith.mulf %2, %47 : vector<4x4xf32>
    %cst_10 = arith.constant dense<0.000000e+00> : vector<4xf32>
    %49 = vector.multi_reduction <add>, %48, %cst_10 [1] : vector<4x4xf32> to vector<4xf32>
    %50 = vector.shape_cast %49 : vector<4xf32> to vector<4x1xf32>
    %51 = arith.addf %46, %50 : vector<4x1xf32>
    %52 = math.tanh %45 : vector<1x4xf32>
    %53 = math.tanh %51 : vector<4x1xf32>
    %54 = vector.extract_strided_slice %7 {offsets = [3, 0], sizes = [1, 4], strides = [1, 1]} : vector<8x4xf32> to vector<1x4xf32>
    %55 = vector.broadcast %53 : vector<4x1xf32> to vector<4x4xf32>
    %56 = arith.mulf %8, %55 : vector<4x4xf32>
    %cst_11 = arith.constant dense<0.000000e+00> : vector<4xf32>
    %57 = vector.multi_reduction <add>, %56, %cst_11 [0] : vector<4x4xf32> to vector<4xf32>
    %58 = vector.shape_cast %57 : vector<4xf32> to vector<1x4xf32>
    %59 = arith.addf %54, %58 : vector<1x4xf32>
    %60 = vector.extract_strided_slice %9 {offsets = [0, 3], sizes = [4, 1], strides = [1, 1]} : vector<4x8xf32> to vector<4x1xf32>
    %61 = vector.broadcast %52 : vector<1x4xf32> to vector<4x4xf32>
    %62 = arith.mulf %2, %61 : vector<4x4xf32>
    %cst_12 = arith.constant dense<0.000000e+00> : vector<4xf32>
    %63 = vector.multi_reduction <add>, %62, %cst_12 [1] : vector<4x4xf32> to vector<4xf32>
    %64 = vector.shape_cast %63 : vector<4xf32> to vector<4x1xf32>
    %65 = arith.addf %60, %64 : vector<4x1xf32>
    %66 = math.tanh %59 : vector<1x4xf32>
    %67 = math.tanh %65 : vector<4x1xf32>
    %68 = vector.extract_strided_slice %7 {offsets = [4, 0], sizes = [1, 4], strides = [1, 1]} : vector<8x4xf32> to vector<1x4xf32>
    %69 = vector.broadcast %67 : vector<4x1xf32> to vector<4x4xf32>
    %70 = arith.mulf %8, %69 : vector<4x4xf32>
    %cst_13 = arith.constant dense<0.000000e+00> : vector<4xf32>
    %71 = vector.multi_reduction <add>, %70, %cst_13 [0] : vector<4x4xf32> to vector<4xf32>
    %72 = vector.shape_cast %71 : vector<4xf32> to vector<1x4xf32>
    %73 = arith.addf %68, %72 : vector<1x4xf32>
    %74 = vector.extract_strided_slice %9 {offsets = [0, 4], sizes = [4, 1], strides = [1, 1]} : vector<4x8xf32> to vector<4x1xf32>
    %75 = vector.broadcast %66 : vector<1x4xf32> to vector<4x4xf32>
    %76 = arith.mulf %2, %75 : vector<4x4xf32>
    %cst_14 = arith.constant dense<0.000000e+00> : vector<4xf32>
    %77 = vector.multi_reduction <add>, %76, %cst_14 [1] : vector<4x4xf32> to vector<4xf32>
    %78 = vector.shape_cast %77 : vector<4xf32> to vector<4x1xf32>
    %79 = arith.addf %74, %78 : vector<4x1xf32>
    %80 = math.tanh %73 : vector<1x4xf32>
    %81 = math.tanh %79 : vector<4x1xf32>
    %82 = vector.extract_strided_slice %7 {offsets = [5, 0], sizes = [1, 4], strides = [1, 1]} : vector<8x4xf32> to vector<1x4xf32>
    %83 = vector.broadcast %81 : vector<4x1xf32> to vector<4x4xf32>
    %84 = arith.mulf %8, %83 : vector<4x4xf32>
    %cst_15 = arith.constant dense<0.000000e+00> : vector<4xf32>
    %85 = vector.multi_reduction <add>, %84, %cst_15 [0] : vector<4x4xf32> to vector<4xf32>
    %86 = vector.shape_cast %85 : vector<4xf32> to vector<1x4xf32>
    %87 = arith.addf %82, %86 : vector<1x4xf32>
    %88 = vector.extract_strided_slice %9 {offsets = [0, 5], sizes = [4, 1], strides = [1, 1]} : vector<4x8xf32> to vector<4x1xf32>
    %89 = vector.broadcast %80 : vector<1x4xf32> to vector<4x4xf32>
    %90 = arith.mulf %2, %89 : vector<4x4xf32>
    %cst_16 = arith.constant dense<0.000000e+00> : vector<4xf32>
    %91 = vector.multi_reduction <add>, %90, %cst_16 [1] : vector<4x4xf32> to vector<4xf32>
    %92 = vector.shape_cast %91 : vector<4xf32> to vector<4x1xf32>
    %93 = arith.addf %88, %92 : vector<4x1xf32>
    %94 = math.tanh %87 : vector<1x4xf32>
    %95 = math.tanh %93 : vector<4x1xf32>
    %96 = vector.extract_strided_slice %7 {offsets = [6, 0], sizes = [1, 4], strides = [1, 1]} : vector<8x4xf32> to vector<1x4xf32>
    %97 = vector.broadcast %95 : vector<4x1xf32> to vector<4x4xf32>
    %98 = arith.mulf %8, %97 : vector<4x4xf32>
    %cst_17 = arith.constant dense<0.000000e+00> : vector<4xf32>
    %99 = vector.multi_reduction <add>, %98, %cst_17 [0] : vector<4x4xf32> to vector<4xf32>
    %100 = vector.shape_cast %99 : vector<4xf32> to vector<1x4xf32>
    %101 = arith.addf %96, %100 : vector<1x4xf32>
    %102 = vector.extract_strided_slice %9 {offsets = [0, 6], sizes = [4, 1], strides = [1, 1]} : vector<4x8xf32> to vector<4x1xf32>
    %103 = vector.broadcast %94 : vector<1x4xf32> to vector<4x4xf32>
    %104 = arith.mulf %2, %103 : vector<4x4xf32>
    %cst_18 = arith.constant dense<0.000000e+00> : vector<4xf32>
    %105 = vector.multi_reduction <add>, %104, %cst_18 [1] : vector<4x4xf32> to vector<4xf32>
    %106 = vector.shape_cast %105 : vector<4xf32> to vector<4x1xf32>
    %107 = arith.addf %102, %106 : vector<4x1xf32>
    %108 = math.tanh %101 : vector<1x4xf32>
    %109 = math.tanh %107 : vector<4x1xf32>
    %110 = vector.extract_strided_slice %7 {offsets = [7, 0], sizes = [1, 4], strides = [1, 1]} : vector<8x4xf32> to vector<1x4xf32>
    %111 = vector.broadcast %109 : vector<4x1xf32> to vector<4x4xf32>
    %112 = arith.mulf %8, %111 : vector<4x4xf32>
    %cst_19 = arith.constant dense<0.000000e+00> : vector<4xf32>
    %113 = vector.multi_reduction <add>, %112, %cst_19 [0] : vector<4x4xf32> to vector<4xf32>
    %114 = vector.shape_cast %113 : vector<4xf32> to vector<1x4xf32>
    %115 = arith.addf %110, %114 : vector<1x4xf32>
    %116 = math.tanh %115 : vector<1x4xf32>
    %117 = tpu.concatenate %24, %38, %52, %66, %80, %94, %108, %116 in 0 : vector<1x4xf32>, vector<1x4xf32>, vector<1x4xf32>, vector<1x4xf32>, vector<1x4xf32>, vector<1x4xf32>, vector<1x4xf32>, vector<1x4xf32> -> vector<8x4xf32>
    %c0_20 = arith.constant 0 : index
    %c0_21 = arith.constant 0 : index
    %118 = vector.load %arg2[%c0_20, %c0_21] : memref<8x4xf32, #tpu.memory_space<vmem>>, vector<8x4xf32>
    tpu.vector_store %arg2[%c0_20, %c0_21], %117 {strides = array<i32>} : memref<8x4xf32, #tpu.memory_space<vmem>>, vector<8x4xf32>,
    return
  }
}

</mosaic_0001>

<llo_original>
// kernel: tpu_custom_call.1
$region0: #{tpu_custom_call.1}
  #allocation0 [shape = 'u32[]', space=smem, size = 0x4, offset = 0x4, fixed_abs, tag = 'smem constant byte address 0x4 - core index']
  #allocation1 [shape = 'u32[72,128]{1,0:T(1,128)}', space=vmem, size = 0x9000, scoped, tag = 'internal scratch']
  %s0 = inlined_call_operand.vmem [shape: f32[8,4], index: 0, kind: input, shape index: {}]
  %s1 = inlined_call_operand.vmem [shape: f32[9,4], index: 1, kind: input, shape index: {}]
  %s2 = inlined_call_operand.vmem [shape: f32[8,4], index: 2, kind: output, shape index: {}]
  %s3 = sld [smem:[#allocation0]]
  $region18: #{tpu_custom_call.1} parent=0
    _
  %s5 = ssub.s32 1, %s3
  %s6 = scalar_select 0, %s5, %s3
  // Predicated region
  $region2: #{tpu_custom_call.1} parent=0 // pred_check
    _
  $region3: #{tpu_custom_call.1} parent=0 // pred_check_branch
    %8 = sbr.rel (0) target = $region5
  $region4: #{tpu_custom_call.1} parent=0 // pred_region
    _
  $region5: #{tpu_custom_call.1} parent=0 // pred_fallthru
    _
  // Predicated region
  $region6: #{tpu_custom_call.1} parent=0 // pred_check
    _
  $region7: #{tpu_custom_call.1} parent=0 // pred_check_branch
    %10 = sbr.rel (0) target = $region9
  $region8: #{tpu_custom_call.1} parent=0 // pred_region
    _
  $region9: #{tpu_custom_call.1} parent=0 // pred_fallthru
    _
  %v11 = vld [vmem:[%s1] sm:$0xff]
  %v12 = vld [vmem:[%s1 + $0x8] sm:$0x1]
  %v13 = vld [vmem:[%s0] sm:$0xff]
  %v14 = vperm.slane %v12, 0
  %vm15 = vcmask 31744
  %v17 = vsel %vm15, %v13, 0
  %v20 = vsel %vm15, %v11, 0
  %22 = vmatpush.xpose.msra.mxu0 0.0
  %23 = vmatpush.xpose.msra.mxu0 0.0
  %24 = vmatpush.xpose.msra.mxu0 0.0
  %25 = vmatpush.xpose.msra.mxu0 0.0
  %26 = vmatpush.xpose.msra.mxu0 0.0
  %27 = vmatpush.xpose.msra.mxu0 0.0
  %28 = vmatpush.xpose.msra.mxu0 0.0
  %29 = vmatpush.xpose.msra.mxu0 0.0
  %30 = vmatpush.xpose.msra.mxu0 0.0
  %31 = vmatpush.xpose.msra.mxu0 0.0
  %32 = vmatpush.xpose.msra.mxu0 0.0
  %33 = vmatpush.xpose.msra.mxu0 0.0
  %34 = vmatpush.xpose.msra.mxu0 0.0
  %35 = vmatpush.xpose.msra.mxu0 0.0
  %36 = vmatpush.xpose.msra.mxu0 0.0
  %v37 = vand.u32 %v20, 4294901760
  %38 = vmatpush.xpose.msra.mxu0 %v37
  %v39 = vand.u32 %v17, 4294901760
  %v40 = vsub.f32 %v17, %v39
  %v41 = vand.u32 %v40, 4294901760
  %v42 = vsub.f32 %v40, %v41
  %v43 = vand.u32 %v42, 4294901760
  %44 = vmatmul.f32.gmra.mxu0 %v43
  %v45 = vpop.f32.mrf.mxu0
  %v46 = vadd.f32 %v14, %v45
  %47 = vdwg.mxu0
  %48 = vmatpush.xpose.msra.mxu0 0.0
  %49 = vmatpush.xpose.msra.mxu0 0.0
  %50 = vmatpush.xpose.msra.mxu0 0.0
  %51 = vmatpush.xpose.msra.mxu0 0.0
  %52 = vmatpush.xpose.msra.mxu0 0.0
  %53 = vmatpush.xpose.msra.mxu0 0.0
  %54 = vmatpush.xpose.msra.mxu0 0.0
  %55 = vmatpush.xpose.msra.mxu0 0.0
  %56 = vmatpush.xpose.msra.mxu0 0.0
  %57 = vmatpush.xpose.msra.mxu0 0.0
  %58 = vmatpush.xpose.msra.mxu0 0.0
  %59 = vmatpush.xpose.msra.mxu0 0.0
  %60 = vmatpush.xpose.msra.mxu0 0.0
  %61 = vmatpush.xpose.msra.mxu0 0.0
  %62 = vmatpush.xpose.msra.mxu0 0.0
  %v63 = vand.u32 %v20, 4294901760
  %v64 = vsub.f32 %v20, %v63
  %v65 = vand.u32 %v64, 4294901760
  %v66 = vsub.f32 %v64, %v65
  %v67 = vand.u32 %v66, 4294901760
  %68 = vmatpush.xpose.msra.mxu0 %v67
  %v69 = vand.u32 %v17, 4294901760
  %70 = vmatmul.f32.gmra.mxu0 %v69
  %v71 = vpop.f32.mrf.mxu0
  %v72 = vadd.f32 %v46, %v71
  %73 = vdwg.mxu0
  %74 = vmatpush.xpose.msra.mxu0 0.0
  %75 = vmatpush.xpose.msra.mxu0 0.0
  %76 = vmatpush.xpose.msra.mxu0 0.0
  %77 = vmatpush.xpose.msra.mxu0 0.0
  %78 = vmatpush.xpose.msra.mxu0 0.0
  %79 = vmatpush.xpose.msra.mxu0 0.0
  %80 = vmatpush.xpose.msra.mxu0 0.0
  %81 = vmatpush.xpose.msra.mxu0 0.0
  %82 = vmatpush.xpose.msra.mxu0 0.0
  %83 = vmatpush.xpose.msra.mxu0 0.0
  %84 = vmatpush.xpose.msra.mxu0 0.0
  %85 = vmatpush.xpose.msra.mxu0 0.0
  %86 = vmatpush.xpose.msra.mxu0 0.0
  %87 = vmatpush.xpose.msra.mxu0 0.0
  %88 = vmatpush.xpose.msra.mxu0 0.0
  %v89 = vand.u32 %v20, 4294901760
  %v90 = vsub.f32 %v20, %v89
  %91 = vmatpush.xpose.msra.mxu0 %v90
  %v92 = vand.u32 %v17, 4294901760
  %v93 = vsub.f32 %v17, %v92
  %94 = vmatmul.f32.gmra.mxu0 %v93
  %v95 = vpop.f32.mrf.mxu0
  %v96 = vadd.f32 %v72, %v95
  %97 = vdwg.mxu0
  %98 = vmatpush.xpose.msra.mxu0 0.0
  %99 = vmatpush.xpose.msra.mxu0 0.0
  %100 = vmatpush.xpose.msra.mxu0 0.0
  %101 = vmatpush.xpose.msra.mxu0 0.0
  %102 = vmatpush.xpose.msra.mxu0 0.0
  %103 = vmatpush.xpose.msra.mxu0 0.0
  %104 = vmatpush.xpose.msra.mxu0 0.0
  %105 = vmatpush.xpose.msra.mxu0 0.0
  %106 = vmatpush.xpose.msra.mxu0 0.0
  %107 = vmatpush.xpose.msra.mxu0 0.0
  %108 = vmatpush.xpose.msra.mxu0 0.0
  %109 = vmatpush.xpose.msra.mxu0 0.0
  %110 = vmatpush.xpose.msra.mxu0 0.0
  %111 = vmatpush.xpose.msra.mxu0 0.0
  %112 = vmatpush.xpose.msra.mxu0 0.0
  %v113 = vand.u32 %v20, 4294901760
  %114 = vmatpush.xpose.msra.mxu0 %v113
  %v115 = vand.u32 %v17, 4294901760
  %v116 = vsub.f32 %v17, %v115
  %v117 = vand.u32 %v116, 4294901760
  %118 = vmatmul.f32.gmra.mxu0 %v117
  %v119 = vpop.f32.mrf.mxu0
  %v120 = vadd.f32 %v96, %v119
  %121 = vdwg.mxu0
  %122 = vmatpush.xpose.msra.mxu0 0.0
  %123 = vmatpush.xpose.msra.mxu0 0.0
  %124 = vmatpush.xpose.msra.mxu0 0.0
  %125 = vmatpush.xpose.msra.mxu0 0.0
  %126 = vmatpush.xpose.msra.mxu0 0.0
  %127 = vmatpush.xpose.msra.mxu0 0.0
  %128 = vmatpush.xpose.msra.mxu0 0.0
  %129 = vmatpush.xpose.msra.mxu0 0.0
  %130 = vmatpush.xpose.msra.mxu0 0.0
  %131 = vmatpush.xpose.msra.mxu0 0.0
  %132 = vmatpush.xpose.msra.mxu0 0.0
  %133 = vmatpush.xpose.msra.mxu0 0.0
  %134 = vmatpush.xpose.msra.mxu0 0.0
  %135 = vmatpush.xpose.msra.mxu0 0.0
  %136 = vmatpush.xpose.msra.mxu0 0.0
  %v137 = vand.u32 %v20, 4294901760
  %v138 = vsub.f32 %v20, %v137
  %v139 = vand.u32 %v138, 4294901760
  %140 = vmatpush.xpose.msra.mxu0 %v139
  %v141 = vand.u32 %v17, 4294901760
  %142 = vmatmul.f32.gmra.mxu0 %v141
  %v143 = vpop.f32.mrf.mxu0
  %v144 = vadd.f32 %v120, %v143
  %145 = vdwg.mxu0
  %146 = vmatpush.xpose.msra.mxu0 0.0
  %147 = vmatpush.xpose.msra.mxu0 0.0
  %148 = vmatpush.xpose.msra.mxu0 0.0
  %149 = vmatpush.xpose.msra.mxu0 0.0
  %150 = vmatpush.xpose.msra.mxu0 0.0
  %151 = vmatpush.xpose.msra.mxu0 0.0
  %152 = vmatpush.xpose.msra.mxu0 0.0
  %153 = vmatpush.xpose.msra.mxu0 0.0
  %154 = vmatpush.xpose.msra.mxu0 0.0
  %155 = vmatpush.xpose.msra.mxu0 0.0
  %156 = vmatpush.xpose.msra.mxu0 0.0
  %157 = vmatpush.xpose.msra.mxu0 0.0
  %158 = vmatpush.xpose.msra.mxu0 0.0
  %159 = vmatpush.xpose.msra.mxu0 0.0
  %160 = vmatpush.xpose.msra.mxu0 0.0
  %v161 = vand.u32 %v20, 4294901760
  %162 = vmatpush.xpose.msra.mxu0 %v161
  %v163 = vand.u32 %v17, 4294901760
  %164 = vmatmul.f32.gmra.mxu0 %v163
  %v165 = vpop.f32.mrf.mxu0
  %v166 = vadd.f32 %v144, %v165
  %167 = vdwg.mxu0
  %v168 = vrot.slane %v11, 4
  %170 = vxpose.xlu0.b32.start [1/16] %v168, 128
  %171 = vxpose.xlu0.b32.cont [2/16] 0.0, 128
  %172 = vxpose.xlu0.b32.cont [3/16] 0.0, 128
  %173 = vxpose.xlu0.b32.cont [4/16] 0.0, 128
  %174 = vxpose.xlu0.b32.cont [5/16] 0.0, 128
  %175 = vxpose.xlu0.b32.cont [6/16] 0.0, 128
  %176 = vxpose.xlu0.b32.cont [7/16] 0.0, 128
  %177 = vxpose.xlu0.b32.cont [8/16] 0.0, 128
  %178 = vxpose.xlu0.b32.cont [9/16] 0.0, 128
  %179 = vxpose.xlu0.b32.cont [10/16] 0.0, 128
  %180 = vxpose.xlu0.b32.cont [11/16] 0.0, 128
  %181 = vxpose.xlu0.b32.cont [12/16] 0.0, 128
  %182 = vxpose.xlu0.b32.cont [13/16] 0.0, 128
  %183 = vxpose.xlu0.b32.cont [14/16] 0.0, 128
  %184 = vxpose.xlu0.b32.cont [15/16] 0.0, 128
  %185 = vxpose.xlu0.b32.end [16/16] 0.0, 128
  %v186 = vpop.trf.xlu0
  %v187 = vpop.trf.xlu0
  %v188 = vpop.trf.xlu0
  %v189 = vpop.trf.xlu0
  %v190 = vpop.trf.xlu0
  %v191 = vpop.trf.xlu0
  %v192 = vpop.trf.xlu0
  %v193 = vpop.trf.xlu0
  %v194 = vpop.trf.xlu0
  %v195 = vpop.trf.xlu0
  %v196 = vpop.trf.xlu0
  %v197 = vpop.trf.xlu0
  %v198 = vpop.trf.xlu0
  %v199 = vpop.trf.xlu0
  %v200 = vpop.trf.xlu0
  %v201 = vpop.trf.xlu0
  %202 = vxpose.xlu0.b32.start [1/16] %v166, 128
  %203 = vxpose.xlu0.b32.cont [2/16] 0.0, 128
  %204 = vxpose.xlu0.b32.cont [3/16] 0.0, 128
  %205 = vxpose.xlu0.b32.cont [4/16] 0.0, 128
  %206 = vxpose.xlu0.b32.cont [5/16] 0.0, 128
  %207 = vxpose.xlu0.b32.cont [6/16] 0.0, 128
  %208 = vxpose.xlu0.b32.cont [7/16] 0.0, 128
  %209 = vxpose.xlu0.b32.cont [8/16] 0.0, 128
  %210 = vxpose.xlu0.b32.cont [9/16] 0.0, 128
  %211 = vxpose.xlu0.b32.cont [10/16] 0.0, 128
  %212 = vxpose.xlu0.b32.cont [11/16] 0.0, 128
  %213 = vxpose.xlu0.b32.cont [12/16] 0.0, 128
  %214 = vxpose.xlu0.b32.cont [13/16] 0.0, 128
  %215 = vxpose.xlu0.b32.cont [14/16] 0.0, 128
  %216 = vxpose.xlu0.b32.cont [15/16] 0.0, 128
  %217 = vxpose.xlu0.b32.end [16/16] 0.0, 128
  %v218 = vpop.trf.xlu0
  %v219 = vpop.trf.xlu0
  %v220 = vpop.trf.xlu0
  %v221 = vpop.trf.xlu0
  %v222 = vpop.trf.xlu0
  %v223 = vpop.trf.xlu0
  %v224 = vpop.trf.xlu0
  %v225 = vpop.trf.xlu0
  %v226 = vpop.trf.xlu0
  %v227 = vpop.trf.xlu0
  %v228 = vpop.trf.xlu0
  %v229 = vpop.trf.xlu0
  %v230 = vpop.trf.xlu0
  %v231 = vpop.trf.xlu0
  %v232 = vpop.trf.xlu0
  %v233 = vpop.trf.xlu0
  %v234 = vmul.f32 %v186, 0.0
  %vm235 = vcmask 27648
  %v236 = vsel %vm235, %v234, 0.0
  %v237 = vrot.slane %v236, 4
  %v238 = vadd.f32 %v236, %v237
  %v239 = vrot.slane %v238, 2
  %v240 = vadd.f32 %v238, %v239
  %v241 = vrot.slane %v240, 1
  %v242 = vadd.f32 %v240, %v241
  %v243 = vadd.f32 %v166, %v242
  %v244 = vmul.f32 %v11, 0.0
  %vm245 = vcmask 31748
  %v246 = vsel %vm245, %v244, 0.0
  %247 = vadd.xlane.f32.xlu0 %v246
  %v248 = vpop.xlane.xlu0 %247
  %v250 = vrot.slane %v248, 4
  %v252 = vadd.f32 %v218, %v250
  %v253 = vtanh.pop %v243
  %v254 = vtanh.pop %v252
  %256 = vset.pattern.permute.xlu0 0
  %257 = vperm.xlu0 %256, %v254
  %v258 = vpop.permute.xlu0 %257
  %v260 = vmul.f32 %v186, %v258
  %v261 = vsel %vm235, %v260, 0.0
  %v262 = vrot.slane %v261, 4
  %v263 = vadd.f32 %v261, %v262
  %v264 = vrot.slane %v263, 2
  %v265 = vadd.f32 %v263, %v264
  %v266 = vrot.slane %v265, 1
  %v267 = vadd.f32 %v265, %v266
  %v268 = vadd.f32 %v166, %v267
  %v269 = vperm.slane %v253, 0
  %v270 = vmul.f32 %v11, %v269
  %v271 = vsel %vm245, %v270, 0.0
  %272 = vadd.xlane.f32.xlu0 %v271
  %v273 = vpop.xlane.xlu0 %272
  %v275 = vrot.slane %v273, 4
  %v277 = vadd.f32 %v218, %v275
  %v278 = vtanh.pop %v268
  %v279 = vtanh.pop %v277
  %281 = vset.pattern.permute.xlu0 1
  %282 = vperm.xlu0 %281, %v279
  %v283 = vpop.permute.xlu0 %282
  %v285 = vmul.f32 %v186, %v283
  %v286 = vsel %vm235, %v285, 0.0
  %v287 = vrot.slane %v286, 4
  %v288 = vadd.f32 %v286, %v287
  %v289 = vrot.slane %v288, 2
  %v290 = vadd.f32 %v288, %v289
  %v291 = vrot.slane %v290, 1
  %v292 = vadd.f32 %v290, %v291
  %v293 = vadd.f32 %v166, %v292
  %v294 = vperm.slane %v278, 1
  %v295 = vmul.f32 %v11, %v294
  %v296 = vsel %vm245, %v295, 0.0
  %297 = vadd.xlane.f32.xlu0 %v296
  %v298 = vpop.xlane.xlu0 %297
  %v300 = vrot.slane %v298, 4
  %v302 = vadd.f32 %v218, %v300
  %v303 = vtanh.pop %v293
  %v304 = vtanh.pop %v302
  %306 = vset.pattern.permute.xlu0 2
  %307 = vperm.xlu0 %306, %v304
  %v308 = vpop.permute.xlu0 %307
  %v310 = vmul.f32 %v186, %v308
  %v311 = vsel %vm235, %v310, 0.0
  %v312 = vrot.slane %v311, 4
  %v313 = vadd.f32 %v311, %v312
  %v314 = vrot.slane %v313, 2
  %v315 = vadd.f32 %v313, %v314
  %v316 = vrot.slane %v315, 1
  %v317 = vadd.f32 %v315, %v316
  %v318 = vadd.f32 %v166, %v317
  %v319 = vperm.slane %v303, 2
  %v320 = vmul.f32 %v11, %v319
  %v321 = vsel %vm245, %v320, 0.0
  %322 = vadd.xlane.f32.xlu0 %v321
  %v323 = vpop.xlane.xlu0 %322
  %v325 = vrot.slane %v323, 4
  %v327 = vadd.f32 %v218, %v325
  %v328 = vtanh.pop %v318
  %v329 = vtanh.pop %v327
  %331 = vset.pattern.permute.xlu0 3
  %332 = vperm.xlu0 %331, %v329
  %v333 = vpop.permute.xlu0 %332
  %v335 = vmul.f32 %v186, %v333
  %v336 = vsel %vm235, %v335, 0.0
  %v337 = vrot.slane %v336, 4
  %v338 = vadd.f32 %v336, %v337
  %v339 = vrot.slane %v338, 2
  %v340 = vadd.f32 %v338, %v339
  %v341 = vrot.slane %v340, 1
  %v342 = vadd.f32 %v340, %v341
  %v343 = vadd.f32 %v166, %v342
  %v344 = vperm.slane %v328, 3
  %v345 = vmul.f32 %v11, %v344
  %v346 = vsel %vm245, %v345, 0.0
  %347 = vadd.xlane.f32.xlu0 %v346
  %v348 = vpop.xlane.xlu0 %347
  %v350 = vrot.slane %v348, 4
  %v352 = vadd.f32 %v218, %v350
  %v353 = vtanh.pop %v343
  %v354 = vtanh.pop %v352
  %356 = vset.pattern.permute.xlu0 4
  %357 = vperm.xlu0 %356, %v354
  %v358 = vpop.permute.xlu0 %357
  %v360 = vmul.f32 %v186, %v358
  %v361 = vsel %vm235, %v360, 0.0
  %v362 = vrot.slane %v361, 4
  %v363 = vadd.f32 %v361, %v362
  %v364 = vrot.slane %v363, 2
  %v365 = vadd.f32 %v363, %v364
  %v366 = vrot.slane %v365, 1
  %v367 = vadd.f32 %v365, %v366
  %v368 = vadd.f32 %v166, %v367
  %v369 = vperm.slane %v353, 4
  %v370 = vmul.f32 %v11, %v369
  %v371 = vsel %vm245, %v370, 0.0
  %372 = vadd.xlane.f32.xlu0 %v371
  %v373 = vpop.xlane.xlu0 %372
  %v375 = vrot.slane %v373, 4
  %v377 = vadd.f32 %v218, %v375
  %v378 = vtanh.pop %v368
  %v379 = vtanh.pop %v377
  %381 = vset.pattern.permute.xlu0 5
  %382 = vperm.xlu0 %381, %v379
  %v383 = vpop.permute.xlu0 %382
  %v385 = vmul.f32 %v186, %v383
  %v386 = vsel %vm235, %v385, 0.0
  %v387 = vrot.slane %v386, 4
  %v388 = vadd.f32 %v386, %v387
  %v389 = vrot.slane %v388, 2
  %v390 = vadd.f32 %v388, %v389
  %v391 = vrot.slane %v390, 1
  %v392 = vadd.f32 %v390, %v391
  %v393 = vadd.f32 %v166, %v392
  %v394 = vperm.slane %v378, 5
  %v395 = vmul.f32 %v11, %v394
  %v396 = vsel %vm245, %v395, 0.0
  %397 = vadd.xlane.f32.xlu0 %v396
  %v398 = vpop.xlane.xlu0 %397
  %v400 = vrot.slane %v398, 4
  %v402 = vadd.f32 %v218, %v400
  %v403 = vtanh.pop %v393
  %v404 = vtanh.pop %v402
  %406 = vset.pattern.permute.xlu0 6
  %407 = vperm.xlu0 %406, %v404
  %v408 = vpop.permute.xlu0 %407
  %v410 = vmul.f32 %v186, %v408
  %v411 = vsel %vm235, %v410, 0.0
  %v412 = vrot.slane %v411, 4
  %v413 = vadd.f32 %v411, %v412
  %v414 = vrot.slane %v413, 2
  %v415 = vadd.f32 %v413, %v414
  %v416 = vrot.slane %v415, 1
  %v417 = vadd.f32 %v415, %v416
  %v418 = vadd.f32 %v166, %v417
  %v419 = vtanh.pop %v418
  %vm420 = vcmask 1040384
  %v421 = vsel %vm420, %v253, %v278
  %vm422 = vcmask 1041408
  %v423 = vsel %vm422, %v421, %v303
  %vm424 = vcmask 1042432
  %v425 = vsel %vm424, %v423, %v328
  %vm426 = vcmask 1043456
  %v427 = vsel %vm426, %v425, %v353
  %vm428 = vcmask 1044480
  %v429 = vsel %vm428, %v427, %v378
  %vm430 = vcmask 1045504
  %v431 = vsel %vm430, %v429, %v403
  %vm432 = vcmask 1046528
  %v433 = vsel %vm432, %v431, %v419
  %434 = vst.msk [vmem:[%s2] sm:$0xff] %vm15, %v433
  // Predicated region
  $region10: #{tpu_custom_call.1} parent=0 // pred_check
    _
  $region11: #{tpu_custom_call.1} parent=0 // pred_check_branch
    %436 = sbr.rel (0) target = $region13
  $region12: #{tpu_custom_call.1} parent=0 // pred_region
    _
  $region13: #{tpu_custom_call.1} parent=0 // pred_fallthru
    _
  // Predicated region
  $region14: #{tpu_custom_call.1} parent=0 // pred_check
    _
  $region15: #{tpu_custom_call.1} parent=0 // pred_check_branch
    %438 = sbr.rel (0) target = $region17
  $region16: #{tpu_custom_call.1} parent=0 // pred_region
    _
  $region17: #{tpu_custom_call.1} parent=0 // pred_fallthru
    _

</llo_original>
